<compile_context>
chip_gen: v7x
topology: tpu7x:2x2x1
jax: 0.10.0
libtpu: 0.0.40
codegen_flags: <defaults>
</compile_context>

<pallas_src>
import jax
import jax.numpy as jnp
from jax.experimental import pallas as pl
from jax.experimental.pallas import tpu as pltpu


def _allamp_kernel(factors_ref, x_ref, o_ref):
    # x_ref : (br, L_pad) VMEM tile of the (flattened) input
    # o_ref : (F, br, L_pad) VMEM tile — one slab per factor
    # factors_ref : (F,) float32 table in SMEM
    x = x_ref[...]
    n_factors = o_ref.shape[0]
    # F is small and static -> unrolled; factor multiply is free under the HBM
    # bound. Factor stays float32 (full precision) and result is cast to the
    # output dtype, matching PyTorch's python-scalar multiply semantics.
    for f in range(n_factors):
        o_ref[f, :, :] = (x * factors_ref[f]).astype(o_ref.dtype)


def _round_up(x: int, m: int) -> int:
    return ((x + m - 1) // m) * m


def all_amp(waveforms: jax.Array, factors, *,
            max_block_rows: int = 512,
            vmem_tile_budget_bytes: int = 16 * 1024 * 1024) -> jax.Array:
    """Pallas implementation of AllAmp.forward.

    waveforms: (N, T, C) array
    factors  : list/tuple of python floats
    returns  : (len(factors) * N, T, C) array, same dtype as input
    """
    n, t, c = waveforms.shape
    n_factors = len(factors)
    dtype = waveforms.dtype
    itemsize = jnp.dtype(dtype).itemsize

    # --- lane-dense 2-D layout: (N, T*C) padded to (N_pad, L_pad) -----------
    L = t * c
    L_pad = _round_up(max(L, 128), 128)

    # Sublane packing multiple: 8 for f32, 16 for bf16, 32 for int8.
    sublane = 8 * max(1, 4 // itemsize)

    # Row-block size: biggest multiple of `sublane` that keeps the
    # double-buffered footprint (input tile + F output tiles) under budget.
    denom = 2 * L_pad * itemsize * (1 + n_factors)
    max_br_vmem = max(sublane, (vmem_tile_budget_bytes // denom) // sublane * sublane)
    br = min(max_block_rows, _round_up(n, sublane), max_br_vmem)
    br = max(sublane, (br // sublane) * sublane)
    n_pad = _round_up(n, br)

    x2d = waveforms.reshape(n, L)
    if (n_pad, L_pad) != (n, L):
        x2d = jnp.pad(x2d, ((0, n_pad - n), (0, L_pad - L)))

    # Keep factors in float32 (full precision multiply, then round to dtype).
    factors_arr = jnp.asarray(factors, dtype=jnp.float32)

    grid = (n_pad // br,)

    out3d = pl.pallas_call(
        _allamp_kernel,
        out_shape=jax.ShapeDtypeStruct((n_factors, n_pad, L_pad), dtype),
        grid=grid,
        in_specs=[
            # Small scalar factor table, whole array in SMEM.
            pl.BlockSpec(memory_space=pltpu.SMEM),
            # One (br, L_pad) input tile per grid step — read exactly once.
            pl.BlockSpec((br, L_pad), lambda i: (i, 0)),
        ],
        # All F output slabs for this row block are written from the resident
        # input tile: HBM traffic = 1 read + F writes (instead of F reads).
        out_specs=pl.BlockSpec((n_factors, br, L_pad), lambda i: (0, i, 0)),
        compiler_params=pltpu.CompilerParams(
            dimension_semantics=("parallel",),
            vmem_limit_bytes=32 * 1024 * 1024,
        ),
    )(factors_arr, x2d)

    # Strip padding and restore (F*N, T, C) — factor-major, like torch.cat.
    return out3d[:, :n, :L].reshape(n_factors * n, t, c)


def all_amp_ref(waveforms, factors):
    """Pure-JAX reference mirroring the PyTorch module."""
    return jnp.concatenate([waveforms * f for f in factors], axis=0)


if __name__ == "__main__":
    key = jax.random.PRNGKey(0)

    # (n_samples, time_points, n_channels) — small EEG-like shapes.
    n_samples, time_points, n_channels = 2, 16, 8
    waveforms = jax.random.normal(
        key, (n_samples, time_points, n_channels), dtype=jnp.float32
    )
    factors = [0.9, 1.1]

    out = jax.block_until_ready(all_amp(waveforms, factors))
    expected = all_amp_ref(waveforms, factors)
    assert out.shape == (len(factors) * n_samples, time_points, n_channels), out.shape
    assert jnp.allclose(out, expected, atol=1e-6, rtol=1e-6), "mismatch vs reference"

    # Exercise the padding / tiling path with non-128-aligned shapes.
    wf2 = jax.random.normal(
        jax.random.PRNGKey(1), (3, 50, 22), dtype=jnp.float32
    )
    factors2 = [0.5, 1.0, 2.0]
    out2 = jax.block_until_ready(all_amp(wf2, factors2))
    exp2 = all_amp_ref(wf2, factors2)
    assert out2.shape == exp2.shape, out2.shape
    assert jnp.allclose(out2, exp2, atol=1e-6, rtol=1e-6), "mismatch vs reference (padded)"

    print("KERNEL_OK")
</pallas_src>

<mosaic_0001>
module attributes {stable_mosaic.version = 11 : i64} {
  func.func @_allamp_kernel(%arg0: i32, %arg1: memref<2xf32, #tpu.memory_space<smem>>, %arg2: memref<8x128xf32, #tpu.memory_space<vmem>>, %arg3: memref<2x8x128xf32, #tpu.memory_space<vmem>>) attributes {dimension_semantics = [#tpu.dimension_semantics<parallel>], iteration_bounds = array<i64: 1>, scalar_prefetch = 0 : i64, scratch_operands = 0 : i64, tpu.core_type = #tpu.core_type<tc>, window_params = [{transform_indices = @transform_0, window_bounds = array<i64: 2>}, {transform_indices = @transform_1, window_bounds = array<i64: 8, 128>}, {transform_indices = @transform_2, window_bounds = array<i64: 2, 8, 128>}]} {
    %c0 = arith.constant 0 : index
    %c0_0 = arith.constant 0 : index
    %0 = vector.load %arg2[%c0, %c0_0] : memref<8x128xf32, #tpu.memory_space<vmem>>, vector<8x128xf32>
    %c0_1 = arith.constant 0 : index
    %1 = memref.load %arg1[%c0_1] : memref<2xf32, #tpu.memory_space<smem>>
    %2 = vector.broadcast %1 : f32 to vector<8x128xf32>
    %3 = arith.mulf %0, %2 : vector<8x128xf32>
    %c0_2 = arith.constant 0 : index
    %c0_3 = arith.constant 0 : index
    %c0_4 = arith.constant 0 : index
    %4 = vector.load %arg3[%c0_2, %c0_3, %c0_4] : memref<2x8x128xf32, #tpu.memory_space<vmem>>, vector<1x8x128xf32>
    %5 = vector.shape_cast %4 : vector<1x8x128xf32> to vector<8x128xf32>
    %6 = vector.shape_cast %3 : vector<8x128xf32> to vector<1x8x128xf32>
    tpu.vector_store %arg3[%c0_2, %c0_3, %c0_4], %6 {strides = array<i32>} : memref<2x8x128xf32, #tpu.memory_space<vmem>>, vector<1x8x128xf32>,
    %c1 = arith.constant 1 : index
    %7 = memref.load %arg1[%c1] : memref<2xf32, #tpu.memory_space<smem>>
    %8 = vector.broadcast %7 : f32 to vector<8x128xf32>
    %9 = arith.mulf %0, %8 : vector<8x128xf32>
    %c1_5 = arith.constant 1 : index
    %c0_6 = arith.constant 0 : index
    %c0_7 = arith.constant 0 : index
    %10 = vector.load %arg3[%c1_5, %c0_6, %c0_7] : memref<2x8x128xf32, #tpu.memory_space<vmem>>, vector<1x8x128xf32>
    %11 = vector.shape_cast %10 : vector<1x8x128xf32> to vector<8x128xf32>
    %12 = vector.shape_cast %9 : vector<8x128xf32> to vector<1x8x128xf32>
    tpu.vector_store %arg3[%c1_5, %c0_6, %c0_7], %12 {strides = array<i32>} : memref<2x8x128xf32, #tpu.memory_space<vmem>>, vector<1x8x128xf32>,
    return
  }
  func.func @transform_0(%arg0: i32) -> i32 {
    %c0_i32 = arith.constant 0 : i32
    %c0_i32_0 = arith.constant 0 : i32
    return %c0_i32 : i32
  }
  func.func @transform_1(%arg0: i32) -> (i32, i32) {
    %c0_i32 = arith.constant 0 : i32
    %c0_i32_0 = arith.constant 0 : i32
    return %arg0, %c0_i32 : i32, i32
  }
  func.func @transform_2(%arg0: i32) -> (i32, i32, i32) {
    %c0_i32 = arith.constant 0 : i32
    %c0_i32_0 = arith.constant 0 : i32
    %c0_i32_1 = arith.constant 0 : i32
    return %c0_i32, %arg0, %c0_i32_0 : i32, i32, i32
  }
}

</mosaic_0001>

<llo_original>
// kernel: tpu_custom_call.1
$region0: #{tpu_custom_call.1}
  #allocation0 [shape = 'u32[]', space=smem, size = 0x4, offset = 0x4, fixed_abs, tag = 'smem constant byte address 0x4 - core index']
  #allocation1 [shape = 'u32[144,128]{1,0:T(1,128)}', space=vmem, size = 0x12000, scoped, tag = 'internal scratch']
  %s0 = inlined_call_operand.hbm [shape: f32[2], index: 0, kind: input, shape index: {}]
  %s1 = inlined_call_operand.hbm [shape: f32[8,128], index: 1, kind: input, shape index: {}]
  %s2 = inlined_call_operand.hbm [shape: f32[2,8,128], index: 2, kind: output, shape index: {}]
  %s3 = sld [smem:[#allocation0]]
  $region26: #{tpu_custom_call.1} parent=0
    _
  %s5 = ssub.s32 1, %s3
  %s6 = scalar_select 0, %s5, %s3
  $region1: #{tpu_custom_call.1} parent=0
    #allocation2 [shape = 'u8[512]{0}', space=smem, size = 0x200, scoped, tag = 'input window, operand 0, single buffered']
    #allocation3 [shape = 's32[1]{0}', space=sflag, size = 0x4, scoped, tag = 'scoped memory for tpu_custom_call.1']
    #allocation4 [shape = 's32[1]{0}', space=sflag, size = 0x4, scoped, tag = 'scoped memory for tpu_custom_call.1']
    #allocation5 [shape = 's32[1]{0}', space=sflag, size = 0x4, scoped, tag = 'scoped memory for tpu_custom_call.1']
    #allocation6 [shape = 'u8[4096]{0}', space=vmem, size = 0x1000, scoped, tag = 'input window, operand 1, single buffered']
    #allocation7 [shape = 'u8[8192]{0}', space=vmem, size = 0x2000, scoped, tag = 'output window, operand 0, single buffered']
    %7 = vsyncpa [#allocation5], 0
    %8 = vsyncpa [#allocation3], 0
    %9 = vsyncpa [#allocation4], 0
    // Predicated region
    $region2: #{tpu_custom_call.1} parent=1 // pred_check
      _
    $region3: #{tpu_custom_call.1} parent=1 // pred_check_branch
      %11 = sbr.rel (0) target = $region5
    $region4: #{tpu_custom_call.1} parent=1 // pred_region
      %s13 = ssub.s32 16, 16
      %14 = vsyncadd [#allocation5], %s13
      %17 = dma.hbm_to_smem %s0, 16, [#allocation2], [#allocation5]
    $region5: #{tpu_custom_call.1} parent=1 // pred_fallthru
      _
    // Predicated region
    $region6: #{tpu_custom_call.1} parent=1 // pred_check
      _
    $region7: #{tpu_custom_call.1} parent=1 // pred_check_branch
      %19 = sbr.rel (0) target = $region9
    $region8: #{tpu_custom_call.1} parent=1 // pred_region
      %s21 = ssub.s32 128, 128
      %22 = vsyncadd [#allocation3], %s21
      %s24 = sshll.u32 [#allocation6], 4
      %s25 = int_to_ptr.vmem [resolvable:$true] %s24
      %27 = dma.hbm_to_vmem [thread:$0]  %s1, 128, %s25, [#allocation3]
    $region9: #{tpu_custom_call.1} parent=1 // pred_fallthru
      _
    // Predicated region
    $region10: #{tpu_custom_call.1} parent=1 // pred_check
      _
    $region11: #{tpu_custom_call.1} parent=1 // pred_check_branch
      %29 = sbr.rel (0) target = $region13
    $region12: #{tpu_custom_call.1} parent=1 // pred_region
      %30 = dma.done [#allocation5], 16
    $region13: #{tpu_custom_call.1} parent=1 // pred_fallthru
      _
    // Predicated region
    $region14: #{tpu_custom_call.1} parent=1 // pred_check
      _
    $region15: #{tpu_custom_call.1} parent=1 // pred_check_branch
      %32 = sbr.rel (0) target = $region17
    $region16: #{tpu_custom_call.1} parent=1 // pred_region
      %33 = dma.done [#allocation3], 128
    $region17: #{tpu_custom_call.1} parent=1 // pred_fallthru
      _
    %34 = sfence
    %v35 = vld [vmem:[#allocation6] sm:$0xff]
    %s36 = sld [smem:[#allocation2]]
    %v37 = vstv %s36
    %v38 = vmul.f32 %v35, %v37
    %39 = vst [vmem:[#allocation7] sm:$0xff] %v38
    %s40 = sld [smem:[#allocation2 + $0x1]]
    %v41 = vstv %s40
    %v42 = vmul.f32 %v35, %v41
    %s43 = scalar_lea.vmem [#allocation7], 8
    %44 = vst [vmem:[%s43] sm:$0xff] %v42
    // Predicated region
    $region18: #{tpu_custom_call.1} parent=1 // pred_check
      _
    $region19: #{tpu_custom_call.1} parent=1 // pred_check_branch
      %46 = sbr.rel (0) target = $region21
    $region20: #{tpu_custom_call.1} parent=1 // pred_region
      %s48 = ssub.s32 256, 256
      %49 = vsyncadd [#allocation4], %s48
      %s50 = sshll.u32 [#allocation7], 4
      %s51 = int_to_ptr.vmem [resolvable:$true] %s50
      %56 = dma.vmem_to_hbm [thread:$0]  %s51, 256, %s2, [#allocation4], 128, 128, 8
    $region21: #{tpu_custom_call.1} parent=1 // pred_fallthru
      _
    // Predicated region
    $region22: #{tpu_custom_call.1} parent=1 // pred_check
      _
    $region23: #{tpu_custom_call.1} parent=1 // pred_check_branch
      %58 = sbr.rel (0) target = $region25
    $region24: #{tpu_custom_call.1} parent=1 // pred_region
      %59 = dma.done [#allocation4], 256
    $region25: #{tpu_custom_call.1} parent=1 // pred_fallthru
      _
    %60 = vsyncpa [#allocation3], 1
    %61 = vsyncpa [#allocation4], 1
    %62 = vsyncpa [#allocation5], 1

</llo_original>
